<compile_context>
chip_gen: v7x
topology: tpu7x:2x2x1
jax: 0.10.0
libtpu: 0.0.40
codegen_flags: <defaults>
</compile_context>

<pallas_src>
import jax
import jax.numpy as jnp
from jax import lax
from jax.experimental import pallas as pl
from jax.experimental.pallas import tpu as pltpu

_UNROLL = 8  # rows per fori_loop iteration (tile_rows is always 8-aligned)


def _round_up(a, m):
    return ((a + m - 1) // m) * m


def _softplus(x):
    # Numerically stable softplus for the wrapper-side epilogue.
    return jnp.maximum(x, 0.0) + jnp.log1p(jnp.exp(-jnp.abs(x)))


def discriminator_forward(D_user_embeddings, D_item_embeddings, D_item_bias,
                          input_user, input_item, pred_data_label,
                          tile_rows=2048):
    """JAX wrapper mirroring Discriminator.forward."""
    n_users, emb_dim = D_user_embeddings.shape
    n_items = D_item_embeddings.shape[0]
    n = int(input_item.shape[0])
    d1 = emb_dim + 1  # embedding dims + folded bias column

    # Batch tiling: 8-aligned, and at least 2 tiles when the batch allows it
    # so the "parallel" grid axis can shard across both v7x TensorCores.
    tn = min(_round_up(int(tile_rows), _UNROLL),
             max(_UNROLL, _round_up((n + 1) // 2, _UNROLL)))
    n_pad = _round_up(n, tn)
    n_tiles = n_pad // tn

    # Augmented, VMEM-resident tables.
    #   utab: [user_emb | 1.0],  itab: [item_emb | item_bias]
    # A trailing all-zero row in each table is the target of tail padding,
    # so padded rows contribute exactly zero to every partial sum.
    utab = jnp.concatenate(
        [D_user_embeddings.astype(jnp.float32),
         jnp.ones((n_users, 1), jnp.float32)], axis=1)
    utab = jnp.concatenate([utab, jnp.zeros((1, d1), jnp.float32)], axis=0)
    itab = jnp.concatenate(
        [D_item_embeddings.astype(jnp.float32),
         D_item_bias.astype(jnp.float32).reshape(n_items, 1)], axis=1)
    itab = jnp.concatenate([itab, jnp.zeros((1, d1), jnp.float32)], axis=0)

    # One packed int32 id array (SMEM scalar prefetch): [uid... | iid... | gid...]
    def _pad_ids(x, pad_idx):
        x = x.astype(jnp.int32).reshape(-1)
        if n_pad > n:
            x = jnp.concatenate([x, jnp.full((n_pad - n,), pad_idx, jnp.int32)])
        return x

    ids_flat = jnp.concatenate([
        _pad_ids(input_user, n_users),        # pad -> zero row of utab
        _pad_ids(input_item, n_items),        # pad -> zero row of itab
        _pad_ids(pred_data_label, n_items),   # pad -> zero row of itab
    ])
    # TODO(synk): for very large batches, move ids from a whole-array SMEM
    # prefetch to per-tile SMEM blocks, and switch the row loop to a
    # vectorized jnp.take gather once its Mosaic lowering is guaranteed.

    def kernel(ids_ref, utab_ref, itab_ref, s_out_ref, g_out_ref):
        base = pl.program_id(0) * tn
        acc0 = jnp.zeros((1, d1), jnp.float32)

        def body(step, carry):
            acc_s, acc_g = carry
            r0 = base + step * _UNROLL
            for j in range(_UNROLL):              # static unroll for ILP
                r = r0 + j
                uid = ids_ref[r]
                iid = ids_ref[n_pad + r]
                gid = ids_ref[2 * n_pad + r]
                u = utab_ref[pl.ds(uid, 1), :]    # (1, d1) dynamic row gather
                it = itab_ref[pl.ds(iid, 1), :]
                gt = itab_ref[pl.ds(gid, 1), :]
                acc_s = acc_s + u * it            # bias rides in the last lane
                acc_g = acc_g + u * gt
            return acc_s, acc_g

        acc_s, acc_g = lax.fori_loop(0, tn // _UNROLL, body, (acc0, acc0))

        # Lane-dense (1,128) partial-sum blocks (no masked 1-lane stores).
        s_out_ref[...] = jnp.full((1, 128), jnp.sum(acc_s), jnp.float32)
        g_out_ref[...] = jnp.full((1, 128), jnp.sum(acc_g), jnp.float32)

    # NOTE: the table BlockSpecs have constant index_maps, so the pipeline
    # DMAs them only once; explicit single-buffering (pl.Buffered(1)) would
    # only trim one spare VMEM buffer and is skipped for portability.
    s_parts, g_parts = pl.pallas_call(
        kernel,
        grid_spec=pltpu.PrefetchScalarGridSpec(
            num_scalar_prefetch=1,
            grid=(n_tiles,),
            in_specs=[
                pl.BlockSpec((n_users + 1, d1), lambda i, ids: (0, 0)),
                pl.BlockSpec((n_items + 1, d1), lambda i, ids: (0, 0)),
            ],
            out_specs=(
                pl.BlockSpec((1, 128), lambda i, ids: (0, i)),
                pl.BlockSpec((1, 128), lambda i, ids: (0, i)),
            ),
        ),
        out_shape=(
            jax.ShapeDtypeStruct((1, n_tiles * 128), jnp.float32),
            jax.ShapeDtypeStruct((1, n_tiles * 128), jnp.float32),
        ),
        compiler_params=pltpu.CompilerParams(
            dimension_semantics=("parallel",)),
    )(ids_flat, utab, itab)

    # O(n_tiles) combine + O(1) epilogue in plain JAX (keeps the grid fully
    # parallel across TensorCores).
    s_total = jnp.sum(s_parts[0, ::128])
    g_total = jnp.sum(g_parts[0, ::128])
    ms = s_total / float(n)     # mean sampled logit
    mg = g_total / float(n)     # mean ground-truth logit
    # loss = -log(sigmoid(mg)) - log(1 - sigmoid(ms)), stable softplus form.
    return _softplus(-mg) + _softplus(ms)


def _reference_forward(D_user_embeddings, D_item_embeddings, D_item_bias,
                       input_user, input_item, pred_data_label):
    """Pure-JAX reference replicating the PyTorch forward exactly."""
    u = D_user_embeddings[input_user, :]
    it = D_item_embeddings[input_item, :]
    g = D_item_embeddings[pred_data_label, :]
    g_b = D_item_bias[pred_data_label]
    it_b = D_item_bias[input_item]
    n = float(input_item.shape[0])
    pre_logits = jnp.sum(u * it, axis=1) + it_b
    d_sampled = jax.nn.sigmoid(jnp.sum(pre_logits) / n)
    d_ground = jax.nn.sigmoid(jnp.sum(jnp.sum(u * g, axis=1) + g_b) / n)
    return -jnp.log(d_ground) - jnp.log(1.0 - d_sampled)


if __name__ == "__main__":
    key = jax.random.PRNGKey(0)

    def _make_case(key, n_users, n_items, emb_dim, batch):
        k_u, k_i, k_b, k_iu, k_ii, k_pl, key = jax.random.split(key, 7)
        D_user = 0.1 * jax.random.normal(k_u, (n_users, emb_dim), jnp.float32)
        D_item = 0.1 * jax.random.normal(k_i, (n_items, emb_dim), jnp.float32)
        D_bias = 0.1 * jax.random.normal(k_b, (n_items,), jnp.float32)
        in_user = jax.random.randint(k_iu, (batch,), 0, n_users, jnp.int32)
        in_item = jax.random.randint(k_ii, (batch,), 0, n_items, jnp.int32)
        in_label = jax.random.randint(k_pl, (batch,), 0, n_items, jnp.int32)
        return key, (D_user, D_item, D_bias, in_user, in_item, in_label)

    # --- case 1: tiny single-tile problem ---------------------------------
    key, args1 = _make_case(key, 16, 32, 32, 8)
    loss1 = jax.block_until_ready(discriminator_forward(*args1))
    ref1 = _reference_forward(*args1)
    assert jnp.allclose(loss1, ref1, atol=5e-4, rtol=5e-4), (loss1, ref1)

    # --- case 2: explicit small tile -> 3 grid tiles + 84 zero-padded rows --
    key, args2 = _make_case(key, 50, 70, 16, 300)
    loss2 = jax.block_until_ready(
        discriminator_forward(*args2, tile_rows=128))
    ref2 = _reference_forward(*args2)
    assert jnp.allclose(loss2, ref2, atol=5e-4, rtol=5e-4), (loss2, ref2)

    # --- case 3: default tiling -> auto-split into 2 tiles (v7x 2-TC path) --
    key, args3 = _make_case(key, 64, 96, 24, 600)
    loss3 = jax.block_until_ready(discriminator_forward(*args3))
    ref3 = _reference_forward(*args3)
    assert jnp.allclose(loss3, ref3, atol=5e-4, rtol=5e-4), (loss3, ref3)

    print("KERNEL_OK")
</pallas_src>

<mosaic_0001>
module attributes {stable_mosaic.version = 11 : i64} {
  func.func @kernel(%arg0: i32, %arg1: memref<24xi32, #tpu.memory_space<smem>>, %arg2: memref<17x33xf32, #tpu.memory_space<vmem>>, %arg3: memref<33x33xf32, #tpu.memory_space<vmem>>, %arg4: memref<1x128xf32, #tpu.memory_space<vmem>>, %arg5: memref<1x128xf32, #tpu.memory_space<vmem>>) attributes {dimension_semantics = [#tpu.dimension_semantics<parallel>], iteration_bounds = array<i64: 1>, scalar_prefetch = 1 : i64, scratch_operands = 0 : i64, tpu.core_type = #tpu.core_type<tc>, window_params = [{pipeline_mode = #tpu.pipeline_mode<synchronous>, transform_indices = @transform_0, window_bounds = array<i64: 17, 33>}, {pipeline_mode = #tpu.pipeline_mode<synchronous>, transform_indices = @transform_1, window_bounds = array<i64: 33, 33>}, {transform_indices = @transform_2, window_bounds = array<i64: 1, 128>}, {transform_indices = @transform_3, window_bounds = array<i64: 1, 128>}]} {
    %c8_i32 = arith.constant 8 : i32
    %0 = arith.muli %arg0, %c8_i32 : i32
    %cst = arith.constant 0.000000e+00 : f32
    %1 = vector.broadcast %cst : f32 to vector<1x33xf32>
    %c0_i32 = arith.constant 0 : i32
    %c8_i32_0 = arith.constant 8 : i32
    %2 = arith.muli %c0_i32, %c8_i32_0 : i32
    %3 = arith.addi %0, %2 : i32
    %c0_i32_1 = arith.constant 0 : i32
    %4 = arith.addi %3, %c0_i32_1 : i32
    %5 = arith.index_cast %4 : i32 to index
    %6 = memref.load %arg1[%5] : memref<24xi32, #tpu.memory_space<smem>>
    %c8_i32_2 = arith.constant 8 : i32
    %7 = arith.addi %c8_i32_2, %4 : i32
    %8 = arith.index_cast %7 : i32 to index
    %9 = memref.load %arg1[%8] : memref<24xi32, #tpu.memory_space<smem>>
    %c16_i32 = arith.constant 16 : i32
    %10 = arith.addi %c16_i32, %4 : i32
    %11 = arith.index_cast %10 : i32 to index
    %12 = memref.load %arg1[%11] : memref<24xi32, #tpu.memory_space<smem>>
    %13 = arith.index_cast %6 : i32 to index
    %c0 = arith.constant 0 : index
    %14 = vector.load %arg2[%13, %c0] : memref<17x33xf32, #tpu.memory_space<vmem>>, vector<1x33xf32>
    %15 = arith.index_cast %9 : i32 to index
    %c0_3 = arith.constant 0 : index
    %16 = vector.load %arg3[%15, %c0_3] : memref<33x33xf32, #tpu.memory_space<vmem>>, vector<1x33xf32>
    %17 = arith.index_cast %12 : i32 to index
    %c0_4 = arith.constant 0 : index
    %18 = vector.load %arg3[%17, %c0_4] : memref<33x33xf32, #tpu.memory_space<vmem>>, vector<1x33xf32>
    %19 = arith.mulf %14, %16 : vector<1x33xf32>
    %20 = arith.addf %1, %19 : vector<1x33xf32>
    %21 = arith.mulf %14, %18 : vector<1x33xf32>
    %22 = arith.addf %1, %21 : vector<1x33xf32>
    %c1_i32 = arith.constant 1 : i32
    %23 = arith.addi %3, %c1_i32 : i32
    %24 = arith.index_cast %23 : i32 to index
    %25 = memref.load %arg1[%24] : memref<24xi32, #tpu.memory_space<smem>>
    %c8_i32_5 = arith.constant 8 : i32
    %26 = arith.addi %c8_i32_5, %23 : i32
    %27 = arith.index_cast %26 : i32 to index
    %28 = memref.load %arg1[%27] : memref<24xi32, #tpu.memory_space<smem>>
    %c16_i32_6 = arith.constant 16 : i32
    %29 = arith.addi %c16_i32_6, %23 : i32
    %30 = arith.index_cast %29 : i32 to index
    %31 = memref.load %arg1[%30] : memref<24xi32, #tpu.memory_space<smem>>
    %32 = arith.index_cast %25 : i32 to index
    %c0_7 = arith.constant 0 : index
    %33 = vector.load %arg2[%32, %c0_7] : memref<17x33xf32, #tpu.memory_space<vmem>>, vector<1x33xf32>
    %34 = arith.index_cast %28 : i32 to index
    %c0_8 = arith.constant 0 : index
    %35 = vector.load %arg3[%34, %c0_8] : memref<33x33xf32, #tpu.memory_space<vmem>>, vector<1x33xf32>
    %36 = arith.index_cast %31 : i32 to index
    %c0_9 = arith.constant 0 : index
    %37 = vector.load %arg3[%36, %c0_9] : memref<33x33xf32, #tpu.memory_space<vmem>>, vector<1x33xf32>
    %38 = arith.mulf %33, %35 : vector<1x33xf32>
    %39 = arith.addf %20, %38 : vector<1x33xf32>
    %40 = arith.mulf %33, %37 : vector<1x33xf32>
    %41 = arith.addf %22, %40 : vector<1x33xf32>
    %c2_i32 = arith.constant 2 : i32
    %42 = arith.addi %3, %c2_i32 : i32
    %43 = arith.index_cast %42 : i32 to index
    %44 = memref.load %arg1[%43] : memref<24xi32, #tpu.memory_space<smem>>
    %c8_i32_10 = arith.constant 8 : i32
    %45 = arith.addi %c8_i32_10, %42 : i32
    %46 = arith.index_cast %45 : i32 to index
    %47 = memref.load %arg1[%46] : memref<24xi32, #tpu.memory_space<smem>>
    %c16_i32_11 = arith.constant 16 : i32
    %48 = arith.addi %c16_i32_11, %42 : i32
    %49 = arith.index_cast %48 : i32 to index
    %50 = memref.load %arg1[%49] : memref<24xi32, #tpu.memory_space<smem>>
    %51 = arith.index_cast %44 : i32 to index
    %c0_12 = arith.constant 0 : index
    %52 = vector.load %arg2[%51, %c0_12] : memref<17x33xf32, #tpu.memory_space<vmem>>, vector<1x33xf32>
    %53 = arith.index_cast %47 : i32 to index
    %c0_13 = arith.constant 0 : index
    %54 = vector.load %arg3[%53, %c0_13] : memref<33x33xf32, #tpu.memory_space<vmem>>, vector<1x33xf32>
    %55 = arith.index_cast %50 : i32 to index
    %c0_14 = arith.constant 0 : index
    %56 = vector.load %arg3[%55, %c0_14] : memref<33x33xf32, #tpu.memory_space<vmem>>, vector<1x33xf32>
    %57 = arith.mulf %52, %54 : vector<1x33xf32>
    %58 = arith.addf %39, %57 : vector<1x33xf32>
    %59 = arith.mulf %52, %56 : vector<1x33xf32>
    %60 = arith.addf %41, %59 : vector<1x33xf32>
    %c3_i32 = arith.constant 3 : i32
    %61 = arith.addi %3, %c3_i32 : i32
    %62 = arith.index_cast %61 : i32 to index
    %63 = memref.load %arg1[%62] : memref<24xi32, #tpu.memory_space<smem>>
    %c8_i32_15 = arith.constant 8 : i32
    %64 = arith.addi %c8_i32_15, %61 : i32
    %65 = arith.index_cast %64 : i32 to index
    %66 = memref.load %arg1[%65] : memref<24xi32, #tpu.memory_space<smem>>
    %c16_i32_16 = arith.constant 16 : i32
    %67 = arith.addi %c16_i32_16, %61 : i32
    %68 = arith.index_cast %67 : i32 to index
    %69 = memref.load %arg1[%68] : memref<24xi32, #tpu.memory_space<smem>>
    %70 = arith.index_cast %63 : i32 to index
    %c0_17 = arith.constant 0 : index
    %71 = vector.load %arg2[%70, %c0_17] : memref<17x33xf32, #tpu.memory_space<vmem>>, vector<1x33xf32>
    %72 = arith.index_cast %66 : i32 to index
    %c0_18 = arith.constant 0 : index
    %73 = vector.load %arg3[%72, %c0_18] : memref<33x33xf32, #tpu.memory_space<vmem>>, vector<1x33xf32>
    %74 = arith.index_cast %69 : i32 to index
    %c0_19 = arith.constant 0 : index
    %75 = vector.load %arg3[%74, %c0_19] : memref<33x33xf32, #tpu.memory_space<vmem>>, vector<1x33xf32>
    %76 = arith.mulf %71, %73 : vector<1x33xf32>
    %77 = arith.addf %58, %76 : vector<1x33xf32>
    %78 = arith.mulf %71, %75 : vector<1x33xf32>
    %79 = arith.addf %60, %78 : vector<1x33xf32>
    %c4_i32 = arith.constant 4 : i32
    %80 = arith.addi %3, %c4_i32 : i32
    %81 = arith.index_cast %80 : i32 to index
    %82 = memref.load %arg1[%81] : memref<24xi32, #tpu.memory_space<smem>>
    %c8_i32_20 = arith.constant 8 : i32
    %83 = arith.addi %c8_i32_20, %80 : i32
    %84 = arith.index_cast %83 : i32 to index
    %85 = memref.load %arg1[%84] : memref<24xi32, #tpu.memory_space<smem>>
    %c16_i32_21 = arith.constant 16 : i32
    %86 = arith.addi %c16_i32_21, %80 : i32
    %87 = arith.index_cast %86 : i32 to index
    %88 = memref.load %arg1[%87] : memref<24xi32, #tpu.memory_space<smem>>
    %89 = arith.index_cast %82 : i32 to index
    %c0_22 = arith.constant 0 : index
    %90 = vector.load %arg2[%89, %c0_22] : memref<17x33xf32, #tpu.memory_space<vmem>>, vector<1x33xf32>
    %91 = arith.index_cast %85 : i32 to index
    %c0_23 = arith.constant 0 : index
    %92 = vector.load %arg3[%91, %c0_23] : memref<33x33xf32, #tpu.memory_space<vmem>>, vector<1x33xf32>
    %93 = arith.index_cast %88 : i32 to index
    %c0_24 = arith.constant 0 : index
    %94 = vector.load %arg3[%93, %c0_24] : memref<33x33xf32, #tpu.memory_space<vmem>>, vector<1x33xf32>
    %95 = arith.mulf %90, %92 : vector<1x33xf32>
    %96 = arith.addf %77, %95 : vector<1x33xf32>
    %97 = arith.mulf %90, %94 : vector<1x33xf32>
    %98 = arith.addf %79, %97 : vector<1x33xf32>
    %c5_i32 = arith.constant 5 : i32
    %99 = arith.addi %3, %c5_i32 : i32
    %100 = arith.index_cast %99 : i32 to index
    %101 = memref.load %arg1[%100] : memref<24xi32, #tpu.memory_space<smem>>
    %c8_i32_25 = arith.constant 8 : i32
    %102 = arith.addi %c8_i32_25, %99 : i32
    %103 = arith.index_cast %102 : i32 to index
    %104 = memref.load %arg1[%103] : memref<24xi32, #tpu.memory_space<smem>>
    %c16_i32_26 = arith.constant 16 : i32
    %105 = arith.addi %c16_i32_26, %99 : i32
    %106 = arith.index_cast %105 : i32 to index
    %107 = memref.load %arg1[%106] : memref<24xi32, #tpu.memory_space<smem>>
    %108 = arith.index_cast %101 : i32 to index
    %c0_27 = arith.constant 0 : index
    %109 = vector.load %arg2[%108, %c0_27] : memref<17x33xf32, #tpu.memory_space<vmem>>, vector<1x33xf32>
    %110 = arith.index_cast %104 : i32 to index
    %c0_28 = arith.constant 0 : index
    %111 = vector.load %arg3[%110, %c0_28] : memref<33x33xf32, #tpu.memory_space<vmem>>, vector<1x33xf32>
    %112 = arith.index_cast %107 : i32 to index
    %c0_29 = arith.constant 0 : index
    %113 = vector.load %arg3[%112, %c0_29] : memref<33x33xf32, #tpu.memory_space<vmem>>, vector<1x33xf32>
    %114 = arith.mulf %109, %111 : vector<1x33xf32>
    %115 = arith.addf %96, %114 : vector<1x33xf32>
    %116 = arith.mulf %109, %113 : vector<1x33xf32>
    %117 = arith.addf %98, %116 : vector<1x33xf32>
    %c6_i32 = arith.constant 6 : i32
    %118 = arith.addi %3, %c6_i32 : i32
    %119 = arith.index_cast %118 : i32 to index
    %120 = memref.load %arg1[%119] : memref<24xi32, #tpu.memory_space<smem>>
    %c8_i32_30 = arith.constant 8 : i32
    %121 = arith.addi %c8_i32_30, %118 : i32
    %122 = arith.index_cast %121 : i32 to index
    %123 = memref.load %arg1[%122] : memref<24xi32, #tpu.memory_space<smem>>
    %c16_i32_31 = arith.constant 16 : i32
    %124 = arith.addi %c16_i32_31, %118 : i32
    %125 = arith.index_cast %124 : i32 to index
    %126 = memref.load %arg1[%125] : memref<24xi32, #tpu.memory_space<smem>>
    %127 = arith.index_cast %120 : i32 to index
    %c0_32 = arith.constant 0 : index
    %128 = vector.load %arg2[%127, %c0_32] : memref<17x33xf32, #tpu.memory_space<vmem>>, vector<1x33xf32>
    %129 = arith.index_cast %123 : i32 to index
    %c0_33 = arith.constant 0 : index
    %130 = vector.load %arg3[%129, %c0_33] : memref<33x33xf32, #tpu.memory_space<vmem>>, vector<1x33xf32>
    %131 = arith.index_cast %126 : i32 to index
    %c0_34 = arith.constant 0 : index
    %132 = vector.load %arg3[%131, %c0_34] : memref<33x33xf32, #tpu.memory_space<vmem>>, vector<1x33xf32>
    %133 = arith.mulf %128, %130 : vector<1x33xf32>
    %134 = arith.addf %115, %133 : vector<1x33xf32>
    %135 = arith.mulf %128, %132 : vector<1x33xf32>
    %136 = arith.addf %117, %135 : vector<1x33xf32>
    %c7_i32 = arith.constant 7 : i32
    %137 = arith.addi %3, %c7_i32 : i32
    %138 = arith.index_cast %137 : i32 to index
    %139 = memref.load %arg1[%138] : memref<24xi32, #tpu.memory_space<smem>>
    %c8_i32_35 = arith.constant 8 : i32
    %140 = arith.addi %c8_i32_35, %137 : i32
    %141 = arith.index_cast %140 : i32 to index
    %142 = memref.load %arg1[%141] : memref<24xi32, #tpu.memory_space<smem>>
    %c16_i32_36 = arith.constant 16 : i32
    %143 = arith.addi %c16_i32_36, %137 : i32
    %144 = arith.index_cast %143 : i32 to index
    %145 = memref.load %arg1[%144] : memref<24xi32, #tpu.memory_space<smem>>
    %146 = arith.index_cast %139 : i32 to index
    %c0_37 = arith.constant 0 : index
    %147 = vector.load %arg2[%146, %c0_37] : memref<17x33xf32, #tpu.memory_space<vmem>>, vector<1x33xf32>
    %148 = arith.index_cast %142 : i32 to index
    %c0_38 = arith.constant 0 : index
    %149 = vector.load %arg3[%148, %c0_38] : memref<33x33xf32, #tpu.memory_space<vmem>>, vector<1x33xf32>
    %150 = arith.index_cast %145 : i32 to index
    %c0_39 = arith.constant 0 : index
    %151 = vector.load %arg3[%150, %c0_39] : memref<33x33xf32, #tpu.memory_space<vmem>>, vector<1x33xf32>
    %152 = arith.mulf %147, %149 : vector<1x33xf32>
    %153 = arith.addf %134, %152 : vector<1x33xf32>
    %154 = arith.mulf %147, %151 : vector<1x33xf32>
    %155 = arith.addf %136, %154 : vector<1x33xf32>
    %c1_i32_40 = arith.constant 1 : i32
    %156 = vector.shape_cast %153 : vector<1x33xf32> to vector<1x1x33xf32>
    %cst_41 = arith.constant dense<0.000000e+00> : vector<1xf32>
    %157 = vector.multi_reduction <add>, %156, %cst_41 [1, 2] : vector<1x1x33xf32> to vector<1xf32>
    %158 = vector.shape_cast %157 : vector<1xf32> to vector<1x1x1xf32>
    %159 = vector.extract %158[0, 0, 0] : f32 from vector<1x1x1xf32>
    %160 = vector.broadcast %159 : f32 to vector<1x128xf32>
    %c0_42 = arith.constant 0 : index
    %c0_43 = arith.constant 0 : index
    %161 = vector.load %arg4[%c0_42, %c0_43] : memref<1x128xf32, #tpu.memory_space<vmem>>, vector<1x128xf32>
    tpu.vector_store %arg4[%c0_42, %c0_43], %160 {strides = array<i32>} : memref<1x128xf32, #tpu.memory_space<vmem>>, vector<1x128xf32>,
    %162 = vector.shape_cast %155 : vector<1x33xf32> to vector<1x1x33xf32>
    %cst_44 = arith.constant dense<0.000000e+00> : vector<1xf32>
    %163 = vector.multi_reduction <add>, %162, %cst_44 [1, 2] : vector<1x1x33xf32> to vector<1xf32>
    %164 = vector.shape_cast %163 : vector<1xf32> to vector<1x1x1xf32>
    %165 = vector.extract %164[0, 0, 0] : f32 from vector<1x1x1xf32>
    %166 = vector.broadcast %165 : f32 to vector<1x128xf32>
    %c0_45 = arith.constant 0 : index
    %c0_46 = arith.constant 0 : index
    %167 = vector.load %arg5[%c0_45, %c0_46] : memref<1x128xf32, #tpu.memory_space<vmem>>, vector<1x128xf32>
    tpu.vector_store %arg5[%c0_45, %c0_46], %166 {strides = array<i32>} : memref<1x128xf32, #tpu.memory_space<vmem>>, vector<1x128xf32>,
    return
  }
  func.func @transform_0(%arg0: i32, %arg1: memref<24xi32, #tpu.memory_space<smem>>) -> (i32, i32) {
    %c0_i32 = arith.constant 0 : i32
    %c0_i32_0 = arith.constant 0 : i32
    %c0_i32_1 = arith.constant 0 : i32
    return %c0_i32, %c0_i32_0 : i32, i32
  }
  func.func @transform_1(%arg0: i32, %arg1: memref<24xi32, #tpu.memory_space<smem>>) -> (i32, i32) {
    %c0_i32 = arith.constant 0 : i32
    %c0_i32_0 = arith.constant 0 : i32
    %c0_i32_1 = arith.constant 0 : i32
    return %c0_i32, %c0_i32_0 : i32, i32
  }
  func.func @transform_2(%arg0: i32, %arg1: memref<24xi32, #tpu.memory_space<smem>>) -> (i32, i32) {
    %c0_i32 = arith.constant 0 : i32
    %c0_i32_0 = arith.constant 0 : i32
    return %c0_i32, %arg0 : i32, i32
  }
  func.func @transform_3(%arg0: i32, %arg1: memref<24xi32, #tpu.memory_space<smem>>) -> (i32, i32) {
    %c0_i32 = arith.constant 0 : i32
    %c0_i32_0 = arith.constant 0 : i32
    return %c0_i32, %arg0 : i32, i32
  }
}

</mosaic_0001>

<llo_original>
// kernel: tpu_custom_call.1
$region0: #{tpu_custom_call.1}
  #allocation0 [shape = 'u32[]', space=smem, size = 0x4, offset = 0x4, fixed_abs, tag = 'smem constant byte address 0x4 - core index']
  #allocation1 [shape = 'u32[144,128]{1,0:T(1,128)}', space=vmem, size = 0x12000, scoped, tag = 'internal scratch']
  #allocation2 [shape = 's32[1]{0}', space=sflag, size = 0x4, scoped, tag = 'scoped memory for tpu_custom_call.1']
  #allocation3 [shape = 'u8[512]{0}', space=smem, size = 0x200, scoped, tag = 'prefetched SMEM operand 0']
  %s0 = inlined_call_operand.hbm [shape: s32[24], index: 0, kind: input, shape index: {}]
  %s1 = inlined_call_operand.hbm [shape: f32[17,33], index: 1, kind: input, shape index: {}]
  %s2 = inlined_call_operand.hbm [shape: f32[33,33], index: 2, kind: input, shape index: {}]
  %s3 = inlined_call_operand.hbm [shape: f32[1,128], index: 3, kind: output, shape index: {0}]
  %s4 = inlined_call_operand.hbm [shape: f32[1,128], index: 4, kind: output, shape index: {1}]
  %5 = xla_tuple %s3, %s4
  %s6 = sld [smem:[#allocation0]]
  $region34: #{tpu_custom_call.1} parent=0
    _
  %s8 = ssub.s32 1, %s6
  %s9 = scalar_select 0, %s8, %s6
  %11 = dma.hbm_to_smem %s0, 16, [#allocation3], [#allocation2]
  %12 = dma.done [#allocation2], 16
  %13 = sfence
  $region1: #{tpu_custom_call.1} parent=0
    #allocation4 [shape = 'u8[12288]{0}', space=vmem, size = 0x3000, scoped, tag = 'input window, operand 1, single buffered']
    #allocation5 [shape = 's32[1]{0}', space=sflag, size = 0x4, scoped, tag = 'scoped memory for tpu_custom_call.1']
    #allocation6 [shape = 's32[1]{0}', space=sflag, size = 0x4, scoped, tag = 'scoped memory for tpu_custom_call.1']
    #allocation7 [shape = 'u8[20480]{0}', space=vmem, size = 0x5000, scoped, tag = 'input window, operand 2, single buffered']
    #allocation8 [shape = 's32[1]{0}', space=sflag, size = 0x4, scoped, tag = 'scoped memory for tpu_custom_call.1']
    #allocation9 [shape = 'u8[512]{0}', space=vmem, size = 0x400, scoped, tag = 'output window, operand 0, single buffered']
    #allocation10 [shape = 'u8[512]{0}', space=vmem, size = 0x400, scoped, tag = 'output window, operand 1, single buffered']
    #allocation11 [shape = 's32[1]{0}', space=sflag, size = 0x4, scoped, tag = 'scoped memory for tpu_custom_call.1']
    %14 = vsyncpa [#allocation5], 0
    %15 = vsyncpa [#allocation8], 0
    %16 = vsyncpa [#allocation6], 0
    %17 = vsyncpa [#allocation11], 0
    // Predicated region
    $region2: #{tpu_custom_call.1} parent=1 // pred_check
      _
    $region3: #{tpu_custom_call.1} parent=1 // pred_check_branch
      %19 = sbr.rel (0) target = $region5
    $region4: #{tpu_custom_call.1} parent=1 // pred_region
      %s21 = ssub.s32 384, 384
      %22 = vsyncadd [#allocation5], %s21
      %s23 = sshll.u32 [#allocation4], 4
      %s24 = int_to_ptr.vmem [resolvable:$true] %s23
      %29 = dma.hbm_to_vmem [thread:$0]  %s1, 384, %s24, [#allocation5], 128, 128, 8
    $region5: #{tpu_custom_call.1} parent=1 // pred_fallthru
      _
    // Predicated region
    $region6: #{tpu_custom_call.1} parent=1 // pred_check
      _
    $region7: #{tpu_custom_call.1} parent=1 // pred_check_branch
      %31 = sbr.rel (0) target = $region9
    $region8: #{tpu_custom_call.1} parent=1 // pred_region
      %s33 = ssub.s32 640, 640
      %34 = vsyncadd [#allocation8], %s33
      %s35 = sshll.u32 [#allocation7], 4
      %s36 = int_to_ptr.vmem [resolvable:$true] %s35
      %41 = dma.hbm_to_vmem [thread:$0]  %s2, 640, %s36, [#allocation8], 128, 128, 8
    $region9: #{tpu_custom_call.1} parent=1 // pred_fallthru
      _
    // Predicated region
    $region10: #{tpu_custom_call.1} parent=1 // pred_check
      _
    $region11: #{tpu_custom_call.1} parent=1 // pred_check_branch
      %43 = sbr.rel (0) target = $region13
    $region12: #{tpu_custom_call.1} parent=1 // pred_region
      %44 = dma.done [#allocation5], 384
    $region13: #{tpu_custom_call.1} parent=1 // pred_fallthru
      _
    // Predicated region
    $region14: #{tpu_custom_call.1} parent=1 // pred_check
      _
    $region15: #{tpu_custom_call.1} parent=1 // pred_check_branch
      %46 = sbr.rel (0) target = $region17
    $region16: #{tpu_custom_call.1} parent=1 // pred_region
      %47 = dma.done [#allocation8], 640
    $region17: #{tpu_custom_call.1} parent=1 // pred_fallthru
      _
    %s48 = smul.u32 0, 8
    %s49 = sld [smem:[#allocation3 + %s48]]
    %s50 = sadd.s32 %s48, 8
    %s51 = sld [smem:[#allocation3 + %s50]]
    %s52 = sadd.s32 %s48, 16
    %s53 = sld [smem:[#allocation3 + %s52]]
    %s54 = scalar_lea.vmem [#allocation4], %s49
    %v55 = vld [vmem:[%s54] sm:$0x1]
    %s56 = scalar_lea.vmem [#allocation7], %s51
    %v57 = vld [vmem:[%s56] sm:$0x1]
    %s58 = scalar_lea.vmem [#allocation7], %s53
    %v59 = vld [vmem:[%s58] sm:$0x1]
    %v60 = vmul.f32 %v55, %v57
    %v61 = vadd.f32 %v60, 0.0
    %v62 = vmul.f32 %v55, %v59
    %v63 = vadd.f32 %v62, 0.0
    %s64 = sadd.s32 %s48, 1
    %s65 = sld [smem:[#allocation3 + %s64]]
    %s66 = sadd.s32 %s48, 9
    %s67 = sld [smem:[#allocation3 + %s66]]
    %s68 = sadd.s32 %s48, 17
    %s69 = sld [smem:[#allocation3 + %s68]]
    %s70 = scalar_lea.vmem [#allocation4], %s65
    %v71 = vld [vmem:[%s70] sm:$0x1]
    %s72 = scalar_lea.vmem [#allocation7], %s67
    %v73 = vld [vmem:[%s72] sm:$0x1]
    %s74 = scalar_lea.vmem [#allocation7], %s69
    %v75 = vld [vmem:[%s74] sm:$0x1]
    %v76 = vmul.f32 %v71, %v73
    %v77 = vadd.f32 %v61, %v76
    %v78 = vmul.f32 %v71, %v75
    %v79 = vadd.f32 %v63, %v78
    %s80 = sadd.s32 %s48, 2
    %s81 = sld [smem:[#allocation3 + %s80]]
    %s82 = sadd.s32 %s48, 10
    %s83 = sld [smem:[#allocation3 + %s82]]
    %s84 = sadd.s32 %s48, 18
    %s85 = sld [smem:[#allocation3 + %s84]]
    %s86 = scalar_lea.vmem [#allocation4], %s81
    %v87 = vld [vmem:[%s86] sm:$0x1]
    %s88 = scalar_lea.vmem [#allocation7], %s83
    %v89 = vld [vmem:[%s88] sm:$0x1]
    %s90 = scalar_lea.vmem [#allocation7], %s85
    %v91 = vld [vmem:[%s90] sm:$0x1]
    %v92 = vmul.f32 %v87, %v89
    %v93 = vadd.f32 %v77, %v92
    %v94 = vmul.f32 %v87, %v91
    %v95 = vadd.f32 %v79, %v94
    %s96 = sadd.s32 %s48, 3
    %s97 = sld [smem:[#allocation3 + %s96]]
    %s98 = sadd.s32 %s48, 11
    %s99 = sld [smem:[#allocation3 + %s98]]
    %s100 = sadd.s32 %s48, 19
    %s101 = sld [smem:[#allocation3 + %s100]]
    %s102 = scalar_lea.vmem [#allocation4], %s97
    %v103 = vld [vmem:[%s102] sm:$0x1]
    %s104 = scalar_lea.vmem [#allocation7], %s99
    %v105 = vld [vmem:[%s104] sm:$0x1]
    %s106 = scalar_lea.vmem [#allocation7], %s101
    %v107 = vld [vmem:[%s106] sm:$0x1]
    %v108 = vmul.f32 %v103, %v105
    %v109 = vadd.f32 %v93, %v108
    %v110 = vmul.f32 %v103, %v107
    %v111 = vadd.f32 %v95, %v110
    %s112 = sadd.s32 %s48, 4
    %s113 = sld [smem:[#allocation3 + %s112]]
    %s114 = sadd.s32 %s48, 12
    %s115 = sld [smem:[#allocation3 + %s114]]
    %s116 = sadd.s32 %s48, 20
    %s117 = sld [smem:[#allocation3 + %s116]]
    %s118 = scalar_lea.vmem [#allocation4], %s113
    %v119 = vld [vmem:[%s118] sm:$0x1]
    %s120 = scalar_lea.vmem [#allocation7], %s115
    %v121 = vld [vmem:[%s120] sm:$0x1]
    %s122 = scalar_lea.vmem [#allocation7], %s117
    %v123 = vld [vmem:[%s122] sm:$0x1]
    %v124 = vmul.f32 %v119, %v121
    %v125 = vadd.f32 %v109, %v124
    %v126 = vmul.f32 %v119, %v123
    %v127 = vadd.f32 %v111, %v126
    %s128 = sadd.s32 %s48, 5
    %s129 = sld [smem:[#allocation3 + %s128]]
    %s130 = sadd.s32 %s48, 13
    %s131 = sld [smem:[#allocation3 + %s130]]
    %s132 = sadd.s32 %s48, 21
    %s133 = sld [smem:[#allocation3 + %s132]]
    %s134 = scalar_lea.vmem [#allocation4], %s129
    %v135 = vld [vmem:[%s134] sm:$0x1]
    %s136 = scalar_lea.vmem [#allocation7], %s131
    %v137 = vld [vmem:[%s136] sm:$0x1]
    %s138 = scalar_lea.vmem [#allocation7], %s133
    %v139 = vld [vmem:[%s138] sm:$0x1]
    %v140 = vmul.f32 %v135, %v137
    %v141 = vadd.f32 %v125, %v140
    %v142 = vmul.f32 %v135, %v139
    %v143 = vadd.f32 %v127, %v142
    %s144 = sadd.s32 %s48, 6
    %s145 = sld [smem:[#allocation3 + %s144]]
    %s146 = sadd.s32 %s48, 14
    %s147 = sld [smem:[#allocation3 + %s146]]
    %s148 = sadd.s32 %s48, 22
    %s149 = sld [smem:[#allocation3 + %s148]]
    %s150 = scalar_lea.vmem [#allocation4], %s145
    %v151 = vld [vmem:[%s150] sm:$0x1]
    %s152 = scalar_lea.vmem [#allocation7], %s147
    %v153 = vld [vmem:[%s152] sm:$0x1]
    %s154 = scalar_lea.vmem [#allocation7], %s149
    %v155 = vld [vmem:[%s154] sm:$0x1]
    %v156 = vmul.f32 %v151, %v153
    %v157 = vadd.f32 %v141, %v156
    %v158 = vmul.f32 %v151, %v155
    %v159 = vadd.f32 %v143, %v158
    %s160 = sadd.s32 %s48, 7
    %s161 = sld [smem:[#allocation3 + %s160]]
    %s162 = sadd.s32 %s48, 15
    %s163 = sld [smem:[#allocation3 + %s162]]
    %s164 = sadd.s32 %s48, 23
    %s165 = sld [smem:[#allocation3 + %s164]]
    %s166 = scalar_lea.vmem [#allocation4], %s161
    %v167 = vld [vmem:[%s166] sm:$0x1]
    %s168 = scalar_lea.vmem [#allocation7], %s163
    %v169 = vld [vmem:[%s168] sm:$0x1]
    %s170 = scalar_lea.vmem [#allocation7], %s165
    %v171 = vld [vmem:[%s170] sm:$0x1]
    %v172 = vmul.f32 %v167, %v169
    %v173 = vadd.f32 %v157, %v172
    %v174 = vmul.f32 %v167, %v171
    %v175 = vadd.f32 %v159, %v174
    %vm176 = vcmask 262144
    %v177 = vsel %vm176, %v173, 0.0
    %178 = vadd.xlane.f32.xlu0 %v177
    %v179 = vpop.xlane.xlu0 %178
    %v180 = vrot.slane %v179, 4
    %v181 = vadd.f32 %v179, %v180
    %v182 = vrot.slane %v181, 2
    %v183 = vadd.f32 %v181, %v182
    %v184 = vrot.slane %v183, 1
    %v185 = vadd.f32 %v183, %v184
    %s186 = vtos %v185
    %v187 = vstv %s186
    %188 = vst [vmem:[#allocation9] sm:$0x1] %v187
    %v189 = vsel %vm176, %v175, 0.0
    %190 = vadd.xlane.f32.xlu0 %v189
    %v191 = vpop.xlane.xlu0 %190
    %v192 = vrot.slane %v191, 4
    %v193 = vadd.f32 %v191, %v192
    %v194 = vrot.slane %v193, 2
    %v195 = vadd.f32 %v193, %v194
    %v196 = vrot.slane %v195, 1
    %v197 = vadd.f32 %v195, %v196
    %s198 = vtos %v197
    %v199 = vstv %s198
    %200 = vst [vmem:[#allocation10] sm:$0x1] %v199
    // Predicated region
    $region18: #{tpu_custom_call.1} parent=1 // pred_check
      _
    $region19: #{tpu_custom_call.1} parent=1 // pred_check_branch
      %202 = sbr.rel (0) target = $region21
    $region20: #{tpu_custom_call.1} parent=1 // pred_region
      %s204 = ssub.s32 16, 16
      %205 = vsyncadd [#allocation6], %s204
      %s207 = sshll.u32 [#allocation9], 4
      %s208 = int_to_ptr.vmem [resolvable:$true] %s207
      %210 = dma.vmem_to_hbm [thread:$0]  %s208, 16, %s3, [#allocation6]
    $region21: #{tpu_custom_call.1} parent=1 // pred_fallthru
      _
    // Predicated region
    $region22: #{tpu_custom_call.1} parent=1 // pred_check
      _
    $region23: #{tpu_custom_call.1} parent=1 // pred_check_branch
      %212 = sbr.rel (0) target = $region25
    $region24: #{tpu_custom_call.1} parent=1 // pred_region
      %s214 = ssub.s32 16, 16
      %215 = vsyncadd [#allocation11], %s214
      %s217 = sshll.u32 [#allocation10], 4
      %s218 = int_to_ptr.vmem [resolvable:$true] %s217
      %220 = dma.vmem_to_hbm [thread:$0]  %s218, 16, %s4, [#allocation11]
    $region25: #{tpu_custom_call.1} parent=1 // pred_fallthru
      _
    // Predicated region
    $region26: #{tpu_custom_call.1} parent=1 // pred_check
      _
    $region27: #{tpu_custom_call.1} parent=1 // pred_check_branch
      %222 = sbr.rel (0) target = $region29
    $region28: #{tpu_custom_call.1} parent=1 // pred_region
      %223 = dma.done [#allocation6], 16
    $region29: #{tpu_custom_call.1} parent=1 // pred_fallthru
      _
    // Predicated region
    $region30: #{tpu_custom_call.1} parent=1 // pred_check
      _
    $region31: #{tpu_custom_call.1} parent=1 // pred_check_branch
      %225 = sbr.rel (0) target = $region33
    $region32: #{tpu_custom_call.1} parent=1 // pred_region
      %226 = dma.done [#allocation11], 16
    $region33: #{tpu_custom_call.1} parent=1 // pred_fallthru
      _
    %227 = vsyncpa [#allocation5], 1
    %228 = vsyncpa [#allocation8], 1
    %229 = vsyncpa [#allocation6], 1
    %230 = vsyncpa [#allocation11], 1

</llo_original>
